<compile_context>
chip_gen: v6e
topology: v6e:2x2x1
jax: 0.10.0
libtpu: 0.0.40
codegen_flags: <defaults>
</compile_context>

<pallas_src>
import math
from functools import partial

import jax
import jax.numpy as jnp
from jax.experimental import pallas as pl
from jax.experimental.pallas import tpu as pltpu


# ---------------------------------------------------------------------------
# Kernels
# ---------------------------------------------------------------------------
def _upsample_kernel_fused(x_ref, w_ref, b_ref, o_ref, *, tr, w_len, n2, precision):
    # x_ref: (TR*W, Cin)       row-tile of tokens
    # w_ref: (Cin, 2*N2)       packed deconv weight, columns = (kh, kw, oc)
    # b_ref: (1, 2*N2)         bias tiled over (kh, kw)
    # o_ref: (TR, 2, W, N2)    output tile, already in pixel-shuffled order
    x = x_ref[...]
    y = jnp.dot(x, w_ref[...], preferred_element_type=jnp.float32,
                precision=precision) + b_ref[...]
    # n2 is a multiple of 128 on this path -> lane-aligned slice, no relayout.
    o_ref[:, 0, :, :] = y[:, :n2].reshape(tr, w_len, n2).astype(o_ref.dtype)
    o_ref[:, 1, :, :] = y[:, n2:].reshape(tr, w_len, n2).astype(o_ref.dtype)


def _upsample_kernel_dual(x_ref, w_ref, b_ref, o_ref, *, tr, w_len, n2, precision):
    # x_ref: (TR*W, Cin); w_ref: (2, Cin, N2); b_ref: (1, N2); o_ref: (TR,2,W,N2)
    x = x_ref[...]
    b = b_ref[...]
    y0 = jnp.dot(x, w_ref[0], preferred_element_type=jnp.float32,
                 precision=precision) + b
    y1 = jnp.dot(x, w_ref[1], preferred_element_type=jnp.float32,
                 precision=precision) + b
    # NOTE: the reshape/strided store is layout-free only when W % 8 == 0
    # (%16 for bf16 output); otherwise a small in-VMEM relayout copy is paid.
    o_ref[:, 0, :, :] = y0.reshape(tr, w_len, n2).astype(o_ref.dtype)
    o_ref[:, 1, :, :] = y1.reshape(tr, w_len, n2).astype(o_ref.dtype)


# ---------------------------------------------------------------------------
# Tiling / VMEM helpers
# ---------------------------------------------------------------------------
def _pad_to(a, m):
    return -(-a // m) * m


def _sublane_multiple(itemsize):
    # minimum second-minor tile multiple per element width
    return {4: 8, 2: 16, 1: 32}.get(itemsize, 8)


def _vmem_capacity_bytes():
    try:
        cap = getattr(pltpu.get_tpu_info(), "vmem_capacity_bytes", None)
        if cap:
            return int(cap)
    except Exception:
        pass
    return 64 * 1024 * 1024  # v7x-sized conservative fallback


def _tile_vmem_bytes(tr, *, w_len, cin, n2, isz, osz, sub_in, sub_out):
    """Double-buffered VMEM footprint estimate for a TR-row tile."""
    x_tile = 2 * _pad_to(tr * w_len, sub_in) * _pad_to(cin, 128) * isz
    o_tile = 2 * tr * 2 * _pad_to(w_len, sub_out) * _pad_to(n2, 128) * osz
    w_buf = 2 * _pad_to(cin, sub_in) * _pad_to(2 * n2, 128) * isz
    b_buf = 2 * 8 * _pad_to(2 * n2, 128) * 4
    return x_tile + o_tile + w_buf + b_buf


def _pick_rows_per_tile(bh, w_len, sub_in, est_fn, budget, max_tokens=None):
    """Largest TR whose tile fits `budget`, with dtype-aware sublane alignment.

    Prefers divisors of B*H (no wasted boundary work) but allows non-divisors
    (grid via pl.cdiv); prefers >= 2 grid steps so pipelining / dual-TC
    sharding is never disabled.
    """
    def ok(tr):
        if max_tokens is not None and tr * w_len > max(max_tokens, w_len):
            return False
        if est_fn(tr) > budget:
            return False
        return (tr * w_len) % sub_in == 0 or tr == bh

    cands = [tr for tr in range(1, bh + 1) if ok(tr)]
    if not cands:
        cands = [tr for tr in range(1, bh + 1)
                 if (tr * w_len) % sub_in == 0] or [bh]
    divisors = [tr for tr in cands if bh % tr == 0]
    pool = divisors if divisors else cands
    tr = max(pool)
    if tr == bh and bh > 1:  # keep >= 2 grid steps (v7x dual-TC, pipelining)
        smaller = [t for t in pool if t <= (bh + 1) // 2]
        if smaller:
            tr = max(smaller)
    return tr


# ---------------------------------------------------------------------------
# Public wrapper
# ---------------------------------------------------------------------------
def upsample_block(x, weight, bias, *, block_tokens=None, compute_dtype=None,
                   out_dtype=None, precision=None):
    """Pallas implementation of UpSampleBlock.forward.

    x      : (B, L, C_in)  tokens, L a perfect square (H = W = sqrt(L))
    weight : (C_in, C_out, 2, 2)   PyTorch ConvTranspose2d weight layout
    bias   : (C_out,)
    returns: (B, 4*L, C_out)
    """
    B, L, Cin = x.shape
    H = int(round(math.sqrt(L)))
    W = H
    assert H * W == L, "L must be a perfect square"
    Cin_w, Cout, KH, KW = weight.shape
    assert Cin_w == Cin and KH == 2 and KW == 2
    N2 = 2 * Cout
    BH = B * H

    if compute_dtype is None:
        compute_dtype = x.dtype      # pass jnp.bfloat16 for the fast path
    if out_dtype is None:
        out_dtype = x.dtype
    if precision is None:
        precision = (jax.lax.Precision.HIGHEST
                     if jnp.dtype(compute_dtype) == jnp.dtype(jnp.float32)
                     else jax.lax.Precision.DEFAULT)

    isz = jnp.dtype(compute_dtype).itemsize
    osz = jnp.dtype(out_dtype).itemsize
    sub_in = _sublane_multiple(isz)
    sub_out = _sublane_multiple(osz)

    x2d = x.reshape(BH * W, Cin).astype(compute_dtype)

    # Fuse the two kh-tap matmuls into one 2*N2-wide dot when the split point
    # is lane-aligned (fills the 256-wide MXU on v6e/v7x, halves weight pushes).
    fused = (N2 % 128 == 0)
    if fused:
        # (Cin, Cout, kh, kw) -> (Cin, kh*2Cout + kw*Cout + oc)
        w_pack = jnp.transpose(weight, (0, 2, 3, 1)).reshape(Cin, 2 * N2)
        w_pack = w_pack.astype(compute_dtype)
        b_pack = jnp.tile(bias, 4).reshape(1, 2 * N2).astype(jnp.float32)
        kernel = _upsample_kernel_fused
        w_spec = pl.BlockSpec((Cin, 2 * N2), lambda i: (0, 0))      # resident
        b_spec = pl.BlockSpec((1, 2 * N2), lambda i: (0, 0))        # resident
    else:
        # (Cin, Cout, kh, kw) -> (kh, Cin, kw*Cout + oc)
        w_pack = jnp.transpose(weight, (2, 0, 3, 1)).reshape(2, Cin, N2)
        w_pack = w_pack.astype(compute_dtype)
        b_pack = jnp.tile(bias, 2).reshape(1, N2).astype(jnp.float32)
        kernel = _upsample_kernel_dual
        w_spec = pl.BlockSpec((2, Cin, N2), lambda i: (0, 0, 0))    # resident
        b_spec = pl.BlockSpec((1, N2), lambda i: (0, 0))            # resident

    # Generation-aware VMEM budget (70% of capacity for the tile search,
    # <=80% requested as the scoped limit so Mosaic keeps internal headroom).
    cap = _vmem_capacity_bytes()
    budget = int(0.70 * cap)
    est_fn = partial(_tile_vmem_bytes, w_len=W, cin=Cin, n2=N2, isz=isz,
                     osz=osz, sub_in=sub_in, sub_out=sub_out)
    TR = _pick_rows_per_tile(BH, W, sub_in, est_fn, budget,
                             max_tokens=block_tokens)
    grid = (pl.cdiv(BH, TR),)

    est = est_fn(TR)
    vmem_limit = int(min(int(0.75 * cap), max(32 * 1024 * 1024, 2 * est)))
    vmem_limit = max(vmem_limit, est + (2 << 20))
    vmem_limit = min(vmem_limit, int(0.80 * cap))

    flops = 2 * (BH * W) * Cin * (4 * Cout)
    bytes_accessed = (x2d.size * isz + w_pack.size * isz + b_pack.size * 4
                      + BH * 2 * W * N2 * osz)

    out4 = pl.pallas_call(
        partial(kernel, tr=TR, w_len=W, n2=N2, precision=precision),
        out_shape=jax.ShapeDtypeStruct((BH, 2, W, N2), out_dtype),
        grid=grid,
        in_specs=[
            pl.BlockSpec((TR * W, Cin), lambda i: (i, 0)),
            w_spec,
            b_spec,
        ],
        out_specs=pl.BlockSpec((TR, 2, W, N2), lambda i: (i, 0, 0, 0)),
        compiler_params=pltpu.CompilerParams(
            dimension_semantics=("parallel",),
            vmem_limit_bytes=vmem_limit,
        ),
        cost_estimate=pl.CostEstimate(
            flops=flops, transcendentals=0, bytes_accessed=bytes_accessed),
    )(x2d, w_pack, b_pack)

    # (B*H, 2, W, 2*Cout) flattens contiguously to ((2h+kh)*2W + 2w+kw, oc)
    # -> pure metadata reshape, no transpose / extra HBM pass.
    return out4.reshape(B, 4 * L, Cout)


# ---------------------------------------------------------------------------
# Reference + tests
# ---------------------------------------------------------------------------
def _reference(x, weight, bias):
    """Pure-JAX reference of the PyTorch ConvTranspose2d(k=2, s=2) semantics."""
    B, L, Cin = x.shape
    H = W = int(round(math.sqrt(L)))
    Cout = weight.shape[1]
    xg = x.reshape(B, H, W, Cin)
    t = jnp.einsum("bhwc,cokl->bhkwlo", xg, weight,
                   precision=jax.lax.Precision.HIGHEST) + bias
    return t.reshape(B, 4 * L, Cout)


def _run_case(key, B, H, Cin, Cout):
    L = H * H
    kx, kw, kb = jax.random.split(key, 3)
    x = jax.random.normal(kx, (B, L, Cin), dtype=jnp.float32)
    weight = 0.02 * jax.random.normal(kw, (Cin, Cout, 2, 2), dtype=jnp.float32)
    bias = 0.01 * jax.random.normal(kb, (Cout,), dtype=jnp.float32)

    out = upsample_block(x, weight, bias)
    out = jax.block_until_ready(out)
    ref = _reference(x, weight, bias)
    assert out.shape == (B, 4 * L, Cout), out.shape
    err = float(jnp.max(jnp.abs(out - ref)))
    assert jnp.allclose(out, ref, atol=1e-4, rtol=1e-4), f"mismatch, max err {err}"


if __name__ == "__main__":
    key = jax.random.PRNGKey(0)
    k1, k2 = jax.random.split(key)

    # Small case (N2 = 8 < 128): dual-dot path, multi-step grid.
    _run_case(k1, B=2, H=4, Cin=4, Cout=4)
    # Lane-aligned case (N2 = 128): fused single-dot path, 2-step grid.
    _run_case(k2, B=2, H=8, Cin=32, Cout=64)

    print("KERNEL_OK")
</pallas_src>

<mosaic_0001>
module attributes {stable_mosaic.version = 11 : i64} {
  func.func @_upsample_kernel_dual(%arg0: i32, %arg1: memref<16x4xf32, #tpu.memory_space<vmem>>, %arg2: memref<2x4x8xf32, #tpu.memory_space<vmem>>, %arg3: memref<1x8xf32, #tpu.memory_space<vmem>>, %arg4: memref<4x2x4x8xf32, #tpu.memory_space<vmem>>) attributes {dimension_semantics = [#tpu.dimension_semantics<parallel>], iteration_bounds = array<i64: 2>, scalar_prefetch = 0 : i64, scratch_operands = 0 : i64, tpu.core_type = #tpu.core_type<tc>, window_params = [{transform_indices = @transform_0, window_bounds = array<i64: 16, 4>}, {pipeline_mode = #tpu.pipeline_mode<synchronous>, transform_indices = @transform_1, window_bounds = array<i64: 2, 4, 8>}, {pipeline_mode = #tpu.pipeline_mode<synchronous>, transform_indices = @transform_2, window_bounds = array<i64: 1, 8>}, {transform_indices = @transform_3, window_bounds = array<i64: 4, 2, 4, 8>}]} {
    %c0 = arith.constant 0 : index
    %c0_0 = arith.constant 0 : index
    %0 = vector.load %arg1[%c0, %c0_0] : memref<16x4xf32, #tpu.memory_space<vmem>>, vector<16x4xf32>
    %c0_1 = arith.constant 0 : index
    %c0_2 = arith.constant 0 : index
    %1 = vector.load %arg3[%c0_1, %c0_2] : memref<1x8xf32, #tpu.memory_space<vmem>>, vector<1x8xf32>
    %c0_3 = arith.constant 0 : index
    %c0_4 = arith.constant 0 : index
    %c0_5 = arith.constant 0 : index
    %2 = vector.load %arg2[%c0_3, %c0_4, %c0_5] : memref<2x4x8xf32, #tpu.memory_space<vmem>>, vector<1x4x8xf32>
    %3 = vector.shape_cast %2 : vector<1x4x8xf32> to vector<4x8xf32>
    %cst = arith.constant dense<0.000000e+00> : vector<16x8xf32>
    %4 = tpu.matmul %0, %3, %cst {dimension_numbers = #tpu.dot_dimension_numbers<[1], [0], [0], [1], [0, 0, 1, 1], [], []>, precision = #tpu.contract_precision<fp32>} : vector<16x4xf32>, vector<4x8xf32>, vector<16x8xf32> -> vector<16x8xf32>
    %5 = vector.broadcast %1 : vector<1x8xf32> to vector<16x8xf32>
    %6 = arith.addf %4, %5 : vector<16x8xf32>
    %c1 = arith.constant 1 : index
    %c0_6 = arith.constant 0 : index
    %c0_7 = arith.constant 0 : index
    %7 = vector.load %arg2[%c1, %c0_6, %c0_7] : memref<2x4x8xf32, #tpu.memory_space<vmem>>, vector<1x4x8xf32>
    %8 = vector.shape_cast %7 : vector<1x4x8xf32> to vector<4x8xf32>
    %cst_8 = arith.constant dense<0.000000e+00> : vector<16x8xf32>
    %9 = tpu.matmul %0, %8, %cst_8 {dimension_numbers = #tpu.dot_dimension_numbers<[1], [0], [0], [1], [0, 0, 1, 1], [], []>, precision = #tpu.contract_precision<fp32>} : vector<16x4xf32>, vector<4x8xf32>, vector<16x8xf32> -> vector<16x8xf32>
    %10 = vector.broadcast %1 : vector<1x8xf32> to vector<16x8xf32>
    %11 = arith.addf %9, %10 : vector<16x8xf32>
    %12 = vector.shape_cast %6 : vector<16x8xf32> to vector<4x4x8xf32>
    %c0_9 = arith.constant 0 : index
    %c0_10 = arith.constant 0 : index
    %c0_11 = arith.constant 0 : index
    %c0_12 = arith.constant 0 : index
    %13 = vector.load %arg4[%c0_9, %c0_10, %c0_11, %c0_12] : memref<4x2x4x8xf32, #tpu.memory_space<vmem>>, vector<4x1x4x8xf32>
    %14 = vector.shape_cast %13 : vector<4x1x4x8xf32> to vector<4x4x8xf32>
    %15 = vector.shape_cast %12 : vector<4x4x8xf32> to vector<4x1x4x8xf32>
    tpu.vector_store %arg4[%c0_9, %c0_10, %c0_11, %c0_12], %15 {strides = array<i32>} : memref<4x2x4x8xf32, #tpu.memory_space<vmem>>, vector<4x1x4x8xf32>,
    %16 = vector.shape_cast %11 : vector<16x8xf32> to vector<4x4x8xf32>
    %c0_13 = arith.constant 0 : index
    %c1_14 = arith.constant 1 : index
    %c0_15 = arith.constant 0 : index
    %c0_16 = arith.constant 0 : index
    %17 = vector.load %arg4[%c0_13, %c1_14, %c0_15, %c0_16] : memref<4x2x4x8xf32, #tpu.memory_space<vmem>>, vector<4x1x4x8xf32>
    %18 = vector.shape_cast %17 : vector<4x1x4x8xf32> to vector<4x4x8xf32>
    %19 = vector.shape_cast %16 : vector<4x4x8xf32> to vector<4x1x4x8xf32>
    tpu.vector_store %arg4[%c0_13, %c1_14, %c0_15, %c0_16], %19 {strides = array<i32>} : memref<4x2x4x8xf32, #tpu.memory_space<vmem>>, vector<4x1x4x8xf32>,
    return
  }
  func.func @transform_0(%arg0: i32) -> (i32, i32) {
    %c0_i32 = arith.constant 0 : i32
    %c0_i32_0 = arith.constant 0 : i32
    return %arg0, %c0_i32 : i32, i32
  }
  func.func @transform_1(%arg0: i32) -> (i32, i32, i32) {
    %c0_i32 = arith.constant 0 : i32
    %c0_i32_0 = arith.constant 0 : i32
    %c0_i32_1 = arith.constant 0 : i32
    %c0_i32_2 = arith.constant 0 : i32
    return %c0_i32, %c0_i32_0, %c0_i32_1 : i32, i32, i32
  }
  func.func @transform_2(%arg0: i32) -> (i32, i32) {
    %c0_i32 = arith.constant 0 : i32
    %c0_i32_0 = arith.constant 0 : i32
    %c0_i32_1 = arith.constant 0 : i32
    return %c0_i32, %c0_i32_0 : i32, i32
  }
  func.func @transform_3(%arg0: i32) -> (i32, i32, i32, i32) {
    %c0_i32 = arith.constant 0 : i32
    %c0_i32_0 = arith.constant 0 : i32
    %c0_i32_1 = arith.constant 0 : i32
    %c0_i32_2 = arith.constant 0 : i32
    return %arg0, %c0_i32, %c0_i32_0, %c0_i32_1 : i32, i32, i32, i32
  }
}

</mosaic_0001>

<llo_original>
// kernel: tpu_custom_call.1
$region0: #{tpu_custom_call.1}
  #allocation0 [shape = 'u32[]', space=smem, size = 0x4, offset = 0x4, fixed_abs, tag = 'smem constant byte address 0x4 - core index']
  #allocation1 [shape = 'u32[144,128]{1,0:T(1,128)}', space=vmem, size = 0x12000, scoped, tag = 'internal scratch']
  %s0 = inlined_call_operand.vmem [shape: f32[32,4], index: 0, kind: input, shape index: {}]
  %s1 = inlined_call_operand.vmem [shape: f32[2,4,8], index: 1, kind: input, shape index: {}]
  %s2 = inlined_call_operand.vmem [shape: f32[1,8], index: 2, kind: input, shape index: {}]
  %s3 = inlined_call_operand.hbm [shape: f32[8,2,4,8], index: 3, kind: output, shape index: {}]
  %s4 = sld [smem:[#allocation0]]
  $region45: #{tpu_custom_call.1} parent=0
    _
  %s6 = ssub.s32 1, %s4
  %s7 = scalar_select 0, %s6, %s4
  $region1: #{tpu_custom_call.1} parent=0
    #allocation2 [shape = 'u8[32768]{0}', space=vmem, size = 0x8000, scoped, tag = 'output window, operand 0']
    #allocation3 [shape = 's32[2]{0}', space=sflag, size = 0x8, scoped, tag = 'scoped memory for tpu_custom_call.1']
    %8 = vsyncpa [#allocation3], 0
    %s9 = scalar_lea.sflag [#allocation3], 1
    %10 = vsyncpa %s9, 0
    loop: start=0, step=1, limit=4
    $region2: #{tpu_custom_call.1} parent=1 // loop_pre_header
      _
    $region3: #{tpu_custom_call.1} parent=1 // loop_header
      %s12 = sphi 0, %s16
      %p13 = scmp.ge.s32.totalorder %s12, 4
      %s22 = sphi 0, %s24
      %s25 = sphi 0, %s22
      %s26 = sphi 0, %s25
      %s42 = sphi 0, %s26
      %s46 = sphi 0, %s46
      %s48 = sphi 0, %s46
      %s49 = sphi 0, %s48
      %s63 = sphi 0, %s49
      %s67 = sphi 0, %s67
      %s69 = sphi 0, %s67
      %s70 = sphi 0, %s69
      %s84 = sphi 0, %s70
      %s90 = sphi 0, %s92
      %s93 = sphi 0, %s90
      %s94 = sphi 0, %s93
      %s110 = sphi 0, %s94
    $region4: #{tpu_custom_call.1} parent=1 // loop_header_branch
      %15 = sbr.rel (%p13) target = $region8
    $region5: #{tpu_custom_call.1} parent=1 // loop_body
      %s17 = ssub.s32 %s12, 1
      %s18 = ssub.s32 %s12, 2
      %s19 = sadd.s32 %s12, 1
      %s20 = ssub.s32 %s12, %s19
      %p21 = scmp.eq.s32.totalorder %s20, 0
      %s23 = sadd.s32 %s22, 1
      %s24 = scalar_select %p21, %s22, %s23
      %p27 = pneg %p21
      %p28 = scmp.eq.s32.totalorder %s12, 1
      %p29 = por %p27, %p28
      %p30 = scmp.ne.s32.totalorder %s22, %s25
      %p31 = scmp.eq.s32.totalorder %s12, 0
      %p32 = por %p30, %p31
      %p33 = scmp.ne.s32.totalorder %s22, %s25
      %p34 = scmp.eq.s32.totalorder %s17, 1
      %p35 = por %p33, %p34
      %p36 = scmp.ne.s32.totalorder %s25, %s26
      %p37 = scmp.eq.s32.totalorder %s17, 0
      %p38 = por %p36, %p37
      %p39 = scmp.ne.s32.totalorder %s25, %s26
      %p40 = scmp.eq.s32.totalorder %s18, 1
      %p41 = por %p39, %p40
      %p43 = scmp.ne.s32.totalorder %s26, %s42
      %p44 = scmp.eq.s32.totalorder %s18, 0
      %p45 = por %p43, %p44
      %s47 = sadd.s32 %s46, 1
      %p50 = scmp.eq.s32.totalorder %s12, 1
      %p51 = scmp.ne.s32.totalorder %s46, %s48
      %p52 = scmp.eq.s32.totalorder %s12, 0
      %p53 = por %p51, %p52
      %p54 = scmp.ne.s32.totalorder %s46, %s48
      %p55 = scmp.eq.s32.totalorder %s17, 1
      %p56 = por %p54, %p55
      %p57 = scmp.ne.s32.totalorder %s48, %s49
      %p58 = scmp.eq.s32.totalorder %s17, 0
      %p59 = por %p57, %p58
      %p60 = scmp.ne.s32.totalorder %s48, %s49
      %p61 = scmp.eq.s32.totalorder %s18, 1
      %p62 = por %p60, %p61
      %p64 = scmp.ne.s32.totalorder %s49, %s63
      %p65 = scmp.eq.s32.totalorder %s18, 0
      %p66 = por %p64, %p65
      %s68 = sadd.s32 %s67, 1
      %p71 = scmp.eq.s32.totalorder %s12, 1
      %p72 = scmp.ne.s32.totalorder %s67, %s69
      %p73 = scmp.eq.s32.totalorder %s12, 0
      %p74 = por %p72, %p73
      %p75 = scmp.ne.s32.totalorder %s67, %s69
      %p76 = scmp.eq.s32.totalorder %s17, 1
      %p77 = por %p75, %p76
      %p78 = scmp.ne.s32.totalorder %s69, %s70
      %p79 = scmp.eq.s32.totalorder %s17, 0
      %p80 = por %p78, %p79
      %p81 = scmp.ne.s32.totalorder %s69, %s70
      %p82 = scmp.eq.s32.totalorder %s18, 1
      %p83 = por %p81, %p82
      %p85 = scmp.ne.s32.totalorder %s70, %s84
      %p86 = scmp.eq.s32.totalorder %s18, 0
      %p87 = por %p85, %p86
      %s88 = ssub.s32 %s12, %s19
      %p89 = scmp.eq.s32.totalorder %s88, 0
      %s91 = sadd.s32 %s90, 1
      %s92 = scalar_select %p89, %s90, %s91
      %p95 = pneg %p89
      %p96 = scmp.eq.s32.totalorder %s12, 1
      %p97 = por %p95, %p96
      %p98 = scmp.ne.s32.totalorder %s90, %s93
      %p99 = scmp.eq.s32.totalorder %s12, 0
      %p100 = por %p98, %p99
      %p101 = scmp.ne.s32.totalorder %s90, %s93
      %p102 = scmp.eq.s32.totalorder %s17, 1
      %p103 = por %p101, %p102
      %p104 = scmp.ne.s32.totalorder %s93, %s94
      %p105 = scmp.eq.s32.totalorder %s17, 0
      %p106 = por %p104, %p105
      %p107 = scmp.ne.s32.totalorder %s93, %s94
      %p108 = scmp.eq.s32.totalorder %s18, 1
      %p109 = por %p107, %p108
      %p111 = scmp.ne.s32.totalorder %s94, %s110
      %p112 = scmp.eq.s32.totalorder %s18, 0
      %p113 = por %p111, %p112
      %p114 = scmp.le.s32.totalorder 1, %s12
      %p115 = scmp.lt.s32.totalorder %s12, 3
      %p116 = pnand %p114, %p115
      %p117 = pneg %p116
      // Predicated region
      $region9: #{tpu_custom_call.1} parent=5 // pred_check
        _
      $region10: #{tpu_custom_call.1} parent=5 // pred_check_branch
        %119 = sbr.rel (%p116) target = $region12
      $region11: #{tpu_custom_call.1} parent=5 // pred_region
        %s120 = ssub.s32 %s12, 1
        // Predicated region
        $region13: #{tpu_custom_call.1} parent=11 // pred_check
          %p121 = pneg %p59
        $region14: #{tpu_custom_call.1} parent=11 // pred_check_branch
          %123 = sbr.rel (%p121) target = $region16
        $region15: #{tpu_custom_call.1} parent=11 // pred_region
          _
        $region16: #{tpu_custom_call.1} parent=11 // pred_fallthru
          _
        // Predicated region
        $region17: #{tpu_custom_call.1} parent=11 // pred_check
          %p124 = pneg %p80
        $region18: #{tpu_custom_call.1} parent=11 // pred_check_branch
          %126 = sbr.rel (%p124) target = $region20
        $region19: #{tpu_custom_call.1} parent=11 // pred_region
          _
        $region20: #{tpu_custom_call.1} parent=11 // pred_fallthru
          _
      $region12: #{tpu_custom_call.1} parent=5 // pred_fallthru
        _
      %p127 = scmp.lt.s32.totalorder %s12, 2
      // Predicated region
      $region21: #{tpu_custom_call.1} parent=5 // pred_check
        %p128 = pneg %p127
      $region22: #{tpu_custom_call.1} parent=5 // pred_check_branch
        %130 = sbr.rel (%p128) target = $region24
      $region23: #{tpu_custom_call.1} parent=5 // pred_region
        // Predicated region
        $region25: #{tpu_custom_call.1} parent=23 // pred_check
          %p131 = pneg %p32
        $region26: #{tpu_custom_call.1} parent=23 // pred_check_branch
          %133 = sbr.rel (%p131) target = $region28
        $region27: #{tpu_custom_call.1} parent=23 // pred_region
          %s134 = smul.u32 2, %s12
          %p135 = scmp.lt.s32.totalorder %s134, 3
          %s136 = scalar_select %p135, %s134, 3
          %s137 = smul.addr %s136, 8
          %s138 = scalar_lea.vmem %s0, %s137
          %s139 = smul.u32 2, %s12
        $region28: #{tpu_custom_call.1} parent=23 // pred_fallthru
          _
      $region24: #{tpu_custom_call.1} parent=5 // pred_fallthru
        _
      %p140 = scmp.le.s32.totalorder 1, %s12
      %p141 = scmp.lt.s32.totalorder %s12, 3
      %p142 = pnand %p140, %p141
      %p143 = pneg %p142
      // Predicated region
      $region29: #{tpu_custom_call.1} parent=5 // pred_check
        _
      $region30: #{tpu_custom_call.1} parent=5 // pred_check_branch
        %145 = sbr.rel (%p142) target = $region32
      $region31: #{tpu_custom_call.1} parent=5 // pred_region
        %s146 = ssub.s32 %s12, 1
        %s147 = smul.u32 2, %s17
        %p148 = scmp.lt.s32.totalorder %s147, 3
        %s149 = scalar_select %p148, %s147, 3
        %s150 = smul.addr %s149, 8
        %s151 = scalar_lea.vmem %s0, %s150
        %p152 = pneg %p38
        %p153 = pneg %p35
        %p154 = pneg %p59
        %p155 = pneg %p56
        %p156 = pneg %p80
        %p157 = pneg %p77
        %p158 = pneg %p106
        %p159 = pneg %p103
        %s160 = sand.u32 %s93, 1
        %s161 = scalar_lea.sflag [#allocation3], %s160
        %s162 = sand.u32 %s93, 1
        %s163 = smul.addr %s162, 32
        %s164 = scalar_lea.vmem [#allocation2], %s163
        %s165 = smul.u32 2, %s17
        %p166 = scmp.lt.s32.totalorder %s165, 3
        %s167 = scalar_select %p166, %s165, 3
        %s168 = smul.addr %s167, 8
        %s169 = scalar_lea.vmem %s0, %s168
        %s170 = smul.u32 2, %s17
        %s171 = smul.u32 4, %s17
        %v172 = vld [vmem:[%s169] sm:$0xff]
        %v173 = vld [vmem:[%s169 + $0x8] sm:$0xff]
        %v174 = vld [vmem:[%s2] sm:$0x1]
        %v175 = vld [vmem:[%s1] sm:$0xf]
        %v177 = vlaneseq
        %v178 = vshrl.u32 %v177, 7
        %v179 = vsub.s32 0, %v178
        %v180 = vrot.slane %v174, %v179
        %vm182 = vcmask 31744
        %v184 = vsel %vm182, %v172, 0
        %v187 = vsel %vm182, %v173, 0
        %vm189 = vcmask 1043456
        %v191 = vsel %vm189, %v175, 0
        %193 = vmatprep.subr.mxu0 0.0
        %194 = vmatpush1.msra.mxu0 0.0
        %195 = vmatprep.subr.mxu0 0.0
        %196 = vmatpush1.msra.mxu0 0.0
        %197 = vmatprep.subr.mxu0 0.0
        %198 = vmatpush1.msra.mxu0 0.0
        %199 = vmatprep.subr.mxu0 0.0
        %200 = vmatpush1.msra.mxu0 0.0
        %201 = vmatprep.subr.mxu0 0.0
        %202 = vmatpush1.msra.mxu0 0.0
        %203 = vmatprep.subr.mxu0 0.0
        %204 = vmatpush1.msra.mxu0 0.0
        %205 = vmatprep.subr.mxu0 0.0
        %206 = vmatpush1.msra.mxu0 0.0
        %207 = vmatprep.subr.mxu0 0.0
        %208 = vmatpush1.msra.mxu0 0.0
        %209 = vmatprep.subr.mxu0 0.0
        %210 = vmatpush1.msra.mxu0 0.0
        %211 = vmatprep.subr.mxu0 0.0
        %212 = vmatpush1.msra.mxu0 0.0
        %213 = vmatprep.subr.mxu0 0.0
        %214 = vmatpush1.msra.mxu0 0.0
        %215 = vmatprep.subr.mxu0 0.0
        %216 = vmatpush1.msra.mxu0 0.0
        %217 = vmatprep.subr.mxu0 0.0
        %218 = vmatpush1.msra.mxu0 0.0
        %219 = vmatprep.subr.mxu0 0.0
        %220 = vmatpush1.msra.mxu0 0.0
        %221 = vmatprep.subr.mxu0 0.0
        %222 = vmatpush1.msra.mxu0 0.0
        %223 = vmatprep.subr.mxu0 0.0
        %v224 = vand.u32 %v191, 4294901760
        %225 = vmatpush1.msra.mxu0 %v224
        %226 = vmatprep.subr.mxu0 0.0
        %227 = vmatpush2.msra.mxu0 0.0
        %228 = vmatprep.subr.mxu0 0.0
        %229 = vmatpush2.msra.mxu0 0.0
        %230 = vmatprep.subr.mxu0 0.0
        %231 = vmatpush2.msra.mxu0 0.0
        %232 = vmatprep.subr.mxu0 0.0
        %233 = vmatpush2.msra.mxu0 0.0
        %234 = vmatprep.subr.mxu0 0.0
        %235 = vmatpush2.msra.mxu0 0.0
        %236 = vmatprep.subr.mxu0 0.0
        %237 = vmatpush2.msra.mxu0 0.0
        %238 = vmatprep.subr.mxu0 0.0
        %239 = vmatpush2.msra.mxu0 0.0
        %240 = vmatprep.subr.mxu0 0.0
        %241 = vmatpush2.msra.mxu0 0.0
        %242 = vmatprep.subr.mxu0 0.0
        %243 = vmatpush2.msra.mxu0 0.0
        %244 = vmatprep.subr.mxu0 0.0
        %245 = vmatpush2.msra.mxu0 0.0
        %246 = vmatprep.subr.mxu0 0.0
        %247 = vmatpush2.msra.mxu0 0.0
        %248 = vmatprep.subr.mxu0 0.0
        %249 = vmatpush2.msra.mxu0 0.0
        %250 = vmatprep.subr.mxu0 0.0
        %251 = vmatpush2.msra.mxu0 0.0
        %252 = vmatprep.subr.mxu0 0.0
        %253 = vmatpush2.msra.mxu0 0.0
        %254 = vmatprep.subr.mxu0 0.0
        %255 = vmatpush2.msra.mxu0 0.0
        %256 = vmatprep.subr.mxu0 0.0
        %257 = vmatpush2.msra.mxu0 0.0
        %258 = vmatprep.mubr.f32.mxu0 0.0
        %v259 = vand.u32 %v184, 4294901760
        %v260 = vsub.f32 %v184, %v259
        %v261 = vand.u32 %v260, 4294901760
        %v262 = vsub.f32 %v260, %v261
        %v263 = vand.u32 %v262, 4294901760
        %264 = vmatmul.mubr.f32.gmra.mxu0 %v263
        %v265 = vpop.f32.mrf.mxu0
        %v266 = vadd.f32 %v180, %v265
        %v267 = vpop.f32.mrf.mxu0
        %268 = vmatprep.mubr.f32.mxu0 0.0
        %v269 = vand.u32 %v187, 4294901760
        %v270 = vsub.f32 %v187, %v269
        %v271 = vand.u32 %v270, 4294901760
        %v272 = vsub.f32 %v270, %v271
        %v273 = vand.u32 %v272, 4294901760
        %274 = vmatmul.mubr.f32.gmra.mxu0 %v273
        %v275 = vpop.f32.mrf.mxu0
        %v276 = vadd.f32 %v180, %v275
        %v277 = vpop.f32.mrf.mxu0
        %278 = vdwg.mxu0
        %279 = vmatprep.subr.mxu0 0.0
        %280 = vmatpush1.msra.mxu0 0.0
        %281 = vmatprep.subr.mxu0 0.0
        %282 = vmatpush1.msra.mxu0 0.0
        %283 = vmatprep.subr.mxu0 0.0
        %284 = vmatpush1.msra.mxu0 0.0
        %285 = vmatprep.subr.mxu0 0.0
        %286 = vmatpush1.msra.mxu0 0.0
        %287 = vmatprep.subr.mxu0 0.0
        %288 = vmatpush1.msra.mxu0 0.0
        %289 = vmatprep.subr.mxu0 0.0
        %290 = vmatpush1.msra.mxu0 0.0
        %291 = vmatprep.subr.mxu0 0.0
        %292 = vmatpush1.msra.mxu0 0.0
        %293 = vmatprep.subr.mxu0 0.0
        %294 = vmatpush1.msra.mxu0 0.0
        %295 = vmatprep.subr.mxu0 0.0
        %296 = vmatpush1.msra.mxu0 0.0
        %297 = vmatprep.subr.mxu0 0.0
        %298 = vmatpush1.msra.mxu0 0.0
        %299 = vmatprep.subr.mxu0 0.0
        %300 = vmatpush1.msra.mxu0 0.0
        %301 = vmatprep.subr.mxu0 0.0
        %302 = vmatpush1.msra.mxu0 0.0
        %303 = vmatprep.subr.mxu0 0.0
        %304 = vmatpush1.msra.mxu0 0.0
        %305 = vmatprep.subr.mxu0 0.0
        %306 = vmatpush1.msra.mxu0 0.0
        %307 = vmatprep.subr.mxu0 0.0
        %308 = vmatpush1.msra.mxu0 0.0
        %309 = vmatprep.subr.mxu0 0.0
        %v310 = vand.u32 %v191, 4294901760
        %v311 = vsub.f32 %v191, %v310
        %v312 = vand.u32 %v311, 4294901760
        %v313 = vsub.f32 %v311, %v312
        %v314 = vand.u32 %v313, 4294901760
        %315 = vmatpush1.msra.mxu0 %v314
        %316 = vmatprep.subr.mxu0 0.0
        %317 = vmatpush2.msra.mxu0 0.0
        %318 = vmatprep.subr.mxu0 0.0
        %319 = vmatpush2.msra.mxu0 0.0
        %320 = vmatprep.subr.mxu0 0.0
        %321 = vmatpush2.msra.mxu0 0.0
        %322 = vmatprep.subr.mxu0 0.0
        %323 = vmatpush2.msra.mxu0 0.0
        %324 = vmatprep.subr.mxu0 0.0
        %325 = vmatpush2.msra.mxu0 0.0
        %326 = vmatprep.subr.mxu0 0.0
        %327 = vmatpush2.msra.mxu0 0.0
        %328 = vmatprep.subr.mxu0 0.0
        %329 = vmatpush2.msra.mxu0 0.0
        %330 = vmatprep.subr.mxu0 0.0
        %331 = vmatpush2.msra.mxu0 0.0
        %332 = vmatprep.subr.mxu0 0.0
        %333 = vmatpush2.msra.mxu0 0.0
        %334 = vmatprep.subr.mxu0 0.0
        %335 = vmatpush2.msra.mxu0 0.0
        %336 = vmatprep.subr.mxu0 0.0
        %337 = vmatpush2.msra.mxu0 0.0
        %338 = vmatprep.subr.mxu0 0.0
        %339 = vmatpush2.msra.mxu0 0.0
        %340 = vmatprep.subr.mxu0 0.0
        %341 = vmatpush2.msra.mxu0 0.0
        %342 = vmatprep.subr.mxu0 0.0
        %343 = vmatpush2.msra.mxu0 0.0
        %344 = vmatprep.subr.mxu0 0.0
        %345 = vmatpush2.msra.mxu0 0.0
        %346 = vmatprep.subr.mxu0 0.0
        %347 = vmatpush2.msra.mxu0 0.0
        %348 = vmatprep.mubr.f32.mxu0 0.0
        %v349 = vand.u32 %v184, 4294901760
        %350 = vmatmul.mubr.f32.gmra.mxu0 %v349
        %v351 = vpop.f32.mrf.mxu0
        %v352 = vadd.f32 %v266, %v351
        %v353 = vpop.f32.mrf.mxu0
        %354 = vmatprep.mubr.f32.mxu0 0.0
        %v355 = vand.u32 %v187, 4294901760
        %356 = vmatmul.mubr.f32.gmra.mxu0 %v355
        %v357 = vpop.f32.mrf.mxu0
        %v358 = vadd.f32 %v276, %v357
        %v359 = vpop.f32.mrf.mxu0
        %360 = vdwg.mxu0
        %361 = vmatprep.subr.mxu0 0.0
        %362 = vmatpush1.msra.mxu0 0.0
        %363 = vmatprep.subr.mxu0 0.0
        %364 = vmatpush1.msra.mxu0 0.0
        %365 = vmatprep.subr.mxu0 0.0
        %366 = vmatpush1.msra.mxu0 0.0
        %367 = vmatprep.subr.mxu0 0.0
        %368 = vmatpush1.msra.mxu0 0.0
        %369 = vmatprep.subr.mxu0 0.0
        %370 = vmatpush1.msra.mxu0 0.0
        %371 = vmatprep.subr.mxu0 0.0
        %372 = vmatpush1.msra.mxu0 0.0
        %373 = vmatprep.subr.mxu0 0.0
        %374 = vmatpush1.msra.mxu0 0.0
        %375 = vmatprep.subr.mxu0 0.0
        %376 = vmatpush1.msra.mxu0 0.0
        %377 = vmatprep.subr.mxu0 0.0
        %378 = vmatpush1.msra.mxu0 0.0
        %379 = vmatprep.subr.mxu0 0.0
        %380 = vmatpush1.msra.mxu0 0.0
        %381 = vmatprep.subr.mxu0 0.0
        %382 = vmatpush1.msra.mxu0 0.0
        %383 = vmatprep.subr.mxu0 0.0
        %384 = vmatpush1.msra.mxu0 0.0
        %385 = vmatprep.subr.mxu0 0.0
        %386 = vmatpush1.msra.mxu0 0.0
        %387 = vmatprep.subr.mxu0 0.0
        %388 = vmatpush1.msra.mxu0 0.0
        %389 = vmatprep.subr.mxu0 0.0
        %390 = vmatpush1.msra.mxu0 0.0
        %391 = vmatprep.subr.mxu0 0.0
        %v392 = vand.u32 %v191, 4294901760
        %v393 = vsub.f32 %v191, %v392
        %394 = vmatpush1.msra.mxu0 %v393
        %395 = vmatprep.subr.mxu0 0.0
        %396 = vmatpush2.msra.mxu0 0.0
        %397 = vmatprep.subr.mxu0 0.0
        %398 = vmatpush2.msra.mxu0 0.0
        %399 = vmatprep.subr.mxu0 0.0
        %400 = vmatpush2.msra.mxu0 0.0
        %401 = vmatprep.subr.mxu0 0.0
        %402 = vmatpush2.msra.mxu0 0.0
        %403 = vmatprep.subr.mxu0 0.0
        %404 = vmatpush2.msra.mxu0 0.0
        %405 = vmatprep.subr.mxu0 0.0
        %406 = vmatpush2.msra.mxu0 0.0
        %407 = vmatprep.subr.mxu0 0.0
        %408 = vmatpush2.msra.mxu0 0.0
        %409 = vmatprep.subr.mxu0 0.0
        %410 = vmatpush2.msra.mxu0 0.0
        %411 = vmatprep.subr.mxu0 0.0
        %412 = vmatpush2.msra.mxu0 0.0
        %413 = vmatprep.subr.mxu0 0.0
        %414 = vmatpush2.msra.mxu0 0.0
        %415 = vmatprep.subr.mxu0 0.0
        %416 = vmatpush2.msra.mxu0 0.0
        %417 = vmatprep.subr.mxu0 0.0
        %418 = vmatpush2.msra.mxu0 0.0
        %419 = vmatprep.subr.mxu0 0.0
        %420 = vmatpush2.msra.mxu0 0.0
        %421 = vmatprep.subr.mxu0 0.0
        %422 = vmatpush2.msra.mxu0 0.0
        %423 = vmatprep.subr.mxu0 0.0
        %424 = vmatpush2.msra.mxu0 0.0
        %425 = vmatprep.subr.mxu0 0.0
        %426 = vmatpush2.msra.mxu0 0.0
        %427 = vmatprep.mubr.f32.mxu0 0.0
        %v428 = vand.u32 %v184, 4294901760
        %v429 = vsub.f32 %v184, %v428
        %430 = vmatmul.mubr.f32.gmra.mxu0 %v429
        %v431 = vpop.f32.mrf.mxu0
        %v432 = vadd.f32 %v352, %v431
        %v433 = vpop.f32.mrf.mxu0
        %434 = vmatprep.mubr.f32.mxu0 0.0
        %v435 = vand.u32 %v187, 4294901760
        %v436 = vsub.f32 %v187, %v435
        %437 = vmatmul.mubr.f32.gmra.mxu0 %v436
        %v438 = vpop.f32.mrf.mxu0
        %v439 = vadd.f32 %v358, %v438
        %v440 = vpop.f32.mrf.mxu0
        %441 = vdwg.mxu0
        %442 = vmatprep.subr.mxu0 0.0
        %443 = vmatpush1.msra.mxu0 0.0
        %444 = vmatprep.subr.mxu0 0.0
        %445 = vmatpush1.msra.mxu0 0.0
        %446 = vmatprep.subr.mxu0 0.0
        %447 = vmatpush1.msra.mxu0 0.0
        %448 = vmatprep.subr.mxu0 0.0
        %449 = vmatpush1.msra.mxu0 0.0
        %450 = vmatprep.subr.mxu0 0.0
        %451 = vmatpush1.msra.mxu0 0.0
        %452 = vmatprep.subr.mxu0 0.0
        %453 = vmatpush1.msra.mxu0 0.0
        %454 = vmatprep.subr.mxu0 0.0
        %455 = vmatpush1.msra.mxu0 0.0
        %456 = vmatprep.subr.mxu0 0.0
        %457 = vmatpush1.msra.mxu0 0.0
        %458 = vmatprep.subr.mxu0 0.0
        %459 = vmatpush1.msra.mxu0 0.0
        %460 = vmatprep.subr.mxu0 0.0
        %461 = vmatpush1.msra.mxu0 0.0
        %462 = vmatprep.subr.mxu0 0.0
        %463 = vmatpush1.msra.mxu0 0.0
        %464 = vmatprep.subr.mxu0 0.0
        %465 = vmatpush1.msra.mxu0 0.0
        %466 = vmatprep.subr.mxu0 0.0
        %467 = vmatpush1.msra.mxu0 0.0
        %468 = vmatprep.subr.mxu0 0.0
        %469 = vmatpush1.msra.mxu0 0.0
        %470 = vmatprep.subr.mxu0 0.0
        %471 = vmatpush1.msra.mxu0 0.0
        %472 = vmatprep.subr.mxu0 0.0
        %v473 = vand.u32 %v191, 4294901760
        %474 = vmatpush1.msra.mxu0 %v473
        %475 = vmatprep.subr.mxu0 0.0
        %476 = vmatpush2.msra.mxu0 0.0
        %477 = vmatprep.subr.mxu0 0.0
        %478 = vmatpush2.msra.mxu0 0.0
        %479 = vmatprep.subr.mxu0 0.0
        %480 = vmatpush2.msra.mxu0 0.0
        %481 = vmatprep.subr.mxu0 0.0
        %482 = vmatpush2.msra.mxu0 0.0
        %483 = vmatprep.subr.mxu0 0.0
        %484 = vmatpush2.msra.mxu0 0.0
        %485 = vmatprep.subr.mxu0 0.0
        %486 = vmatpush2.msra.mxu0 0.0
        %487 = vmatprep.subr.mxu0 0.0
        %488 = vmatpush2.msra.mxu0 0.0
        %489 = vmatprep.subr.mxu0 0.0
        %490 = vmatpush2.msra.mxu0 0.0
        %491 = vmatprep.subr.mxu0 0.0
        %492 = vmatpush2.msra.mxu0 0.0
        %493 = vmatprep.subr.mxu0 0.0
        %494 = vmatpush2.msra.mxu0 0.0
        %495 = vmatprep.subr.mxu0 0.0
        %496 = vmatpush2.msra.mxu0 0.0
        %497 = vmatprep.subr.mxu0 0.0
        %498 = vmatpush2.msra.mxu0 0.0
        %499 = vmatprep.subr.mxu0 0.0
        %500 = vmatpush2.msra.mxu0 0.0
        %501 = vmatprep.subr.mxu0 0.0
        %502 = vmatpush2.msra.mxu0 0.0
        %503 = vmatprep.subr.mxu0 0.0
        %504 = vmatpush2.msra.mxu0 0.0
        %505 = vmatprep.subr.mxu0 0.0
        %506 = vmatpush2.msra.mxu0 0.0
        %507 = vmatprep.mubr.f32.mxu0 0.0
        %v508 = vand.u32 %v184, 4294901760
        %v509 = vsub.f32 %v184, %v508
        %v510 = vand.u32 %v509, 4294901760
        %511 = vmatmul.mubr.f32.gmra.mxu0 %v510
        %v512 = vpop.f32.mrf.mxu0
        %v513 = vadd.f32 %v432, %v512
        %v514 = vpop.f32.mrf.mxu0
        %515 = vmatprep.mubr.f32.mxu0 0.0
        %v516 = vand.u32 %v187, 4294901760
        %v517 = vsub.f32 %v187, %v516
        %v518 = vand.u32 %v517, 4294901760
        %519 = vmatmul.mubr.f32.gmra.mxu0 %v518
        %v520 = vpop.f32.mrf.mxu0
        %v521 = vadd.f32 %v439, %v520
        %v522 = vpop.f32.mrf.mxu0
        %523 = vdwg.mxu0
        %524 = vmatprep.subr.mxu0 0.0
        %525 = vmatpush1.msra.mxu0 0.0
        %526 = vmatprep.subr.mxu0 0.0
        %527 = vmatpush1.msra.mxu0 0.0
        %528 = vmatprep.subr.mxu0 0.0
        %529 = vmatpush1.msra.mxu0 0.0
        %530 = vmatprep.subr.mxu0 0.0
        %531 = vmatpush1.msra.mxu0 0.0
        %532 = vmatprep.subr.mxu0 0.0
        %533 = vmatpush1.msra.mxu0 0.0
        %534 = vmatprep.subr.mxu0 0.0
        %535 = vmatpush1.msra.mxu0 0.0
        %536 = vmatprep.subr.mxu0 0.0
        %537 = vmatpush1.msra.mxu0 0.0
        %538 = vmatprep.subr.mxu0 0.0
        %539 = vmatpush1.msra.mxu0 0.0
        %540 = vmatprep.subr.mxu0 0.0
        %541 = vmatpush1.msra.mxu0 0.0
        %542 = vmatprep.subr.mxu0 0.0
        %543 = vmatpush1.msra.mxu0 0.0
        %544 = vmatprep.subr.mxu0 0.0
        %545 = vmatpush1.msra.mxu0 0.0
        %546 = vmatprep.subr.mxu0 0.0
        %547 = vmatpush1.msra.mxu0 0.0
        %548 = vmatprep.subr.mxu0 0.0
        %549 = vmatpush1.msra.mxu0 0.0
        %550 = vmatprep.subr.mxu0 0.0
        %551 = vmatpush1.msra.mxu0 0.0
        %552 = vmatprep.subr.mxu0 0.0
        %553 = vmatpush1.msra.mxu0 0.0
        %554 = vmatprep.subr.mxu0 0.0
        %v555 = vand.u32 %v191, 4294901760
        %v556 = vsub.f32 %v191, %v555
        %v557 = vand.u32 %v556, 4294901760
        %558 = vmatpush1.msra.mxu0 %v557
        %559 = vmatprep.subr.mxu0 0.0
        %560 = vmatpush2.msra.mxu0 0.0
        %561 = vmatprep.subr.mxu0 0.0
        %562 = vmatpush2.msra.mxu0 0.0
        %563 = vmatprep.subr.mxu0 0.0
        %564 = vmatpush2.msra.mxu0 0.0
        %565 = vmatprep.subr.mxu0 0.0
        %566 = vmatpush2.msra.mxu0 0.0
        %567 = vmatprep.subr.mxu0 0.0
        %568 = vmatpush2.msra.mxu0 0.0
        %569 = vmatprep.subr.mxu0 0.0
        %570 = vmatpush2.msra.mxu0 0.0
        %571 = vmatprep.subr.mxu0 0.0
        %572 = vmatpush2.msra.mxu0 0.0
        %573 = vmatprep.subr.mxu0 0.0
        %574 = vmatpush2.msra.mxu0 0.0
        %575 = vmatprep.subr.mxu0 0.0
        %576 = vmatpush2.msra.mxu0 0.0
        %577 = vmatprep.subr.mxu0 0.0
        %578 = vmatpush2.msra.mxu0 0.0
        %579 = vmatprep.subr.mxu0 0.0
        %580 = vmatpush2.msra.mxu0 0.0
        %581 = vmatprep.subr.mxu0 0.0
        %582 = vmatpush2.msra.mxu0 0.0
        %583 = vmatprep.subr.mxu0 0.0
        %584 = vmatpush2.msra.mxu0 0.0
        %585 = vmatprep.subr.mxu0 0.0
        %586 = vmatpush2.msra.mxu0 0.0
        %587 = vmatprep.subr.mxu0 0.0
        %588 = vmatpush2.msra.mxu0 0.0
        %589 = vmatprep.subr.mxu0 0.0
        %590 = vmatpush2.msra.mxu0 0.0
        %591 = vmatprep.mubr.f32.mxu0 0.0
        %v592 = vand.u32 %v184, 4294901760
        %593 = vmatmul.mubr.f32.gmra.mxu0 %v592
        %v594 = vpop.f32.mrf.mxu0
        %v595 = vadd.f32 %v513, %v594
        %v596 = vpop.f32.mrf.mxu0
        %597 = vmatprep.mubr.f32.mxu0 0.0
        %v598 = vand.u32 %v187, 4294901760
        %599 = vmatmul.mubr.f32.gmra.mxu0 %v598
        %v600 = vpop.f32.mrf.mxu0
        %v601 = vadd.f32 %v521, %v600
        %v602 = vpop.f32.mrf.mxu0
        %603 = vdwg.mxu0
        %604 = vmatprep.subr.mxu0 0.0
        %605 = vmatpush1.msra.mxu0 0.0
        %606 = vmatprep.subr.mxu0 0.0
        %607 = vmatpush1.msra.mxu0 0.0
        %608 = vmatprep.subr.mxu0 0.0
        %609 = vmatpush1.msra.mxu0 0.0
        %610 = vmatprep.subr.mxu0 0.0
        %611 = vmatpush1.msra.mxu0 0.0
        %612 = vmatprep.subr.mxu0 0.0
        %613 = vmatpush1.msra.mxu0 0.0
        %614 = vmatprep.subr.mxu0 0.0
        %615 = vmatpush1.msra.mxu0 0.0
        %616 = vmatprep.subr.mxu0 0.0
        %617 = vmatpush1.msra.mxu0 0.0
        %618 = vmatprep.subr.mxu0 0.0
        %619 = vmatpush1.msra.mxu0 0.0
        %620 = vmatprep.subr.mxu0 0.0
        %621 = vmatpush1.msra.mxu0 0.0
        %622 = vmatprep.subr.mxu0 0.0
        %623 = vmatpush1.msra.mxu0 0.0
        %624 = vmatprep.subr.mxu0 0.0
        %625 = vmatpush1.msra.mxu0 0.0
        %626 = vmatprep.subr.mxu0 0.0
        %627 = vmatpush1.msra.mxu0 0.0
        %628 = vmatprep.subr.mxu0 0.0
        %629 = vmatpush1.msra.mxu0 0.0
        %630 = vmatprep.subr.mxu0 0.0
        %631 = vmatpush1.msra.mxu0 0.0
        %632 = vmatprep.subr.mxu0 0.0
        %633 = vmatpush1.msra.mxu0 0.0
        %634 = vmatprep.subr.mxu0 0.0
        %v635 = vand.u32 %v191, 4294901760
        %636 = vmatpush1.msra.mxu0 %v635
        %637 = vmatprep.subr.mxu0 0.0
        %638 = vmatpush2.msra.mxu0 0.0
        %639 = vmatprep.subr.mxu0 0.0
        %640 = vmatpush2.msra.mxu0 0.0
        %641 = vmatprep.subr.mxu0 0.0
        %642 = vmatpush2.msra.mxu0 0.0
        %643 = vmatprep.subr.mxu0 0.0
        %644 = vmatpush2.msra.mxu0 0.0
        %645 = vmatprep.subr.mxu0 0.0
        %646 = vmatpush2.msra.mxu0 0.0
        %647 = vmatprep.subr.mxu0 0.0
        %648 = vmatpush2.msra.mxu0 0.0
        %649 = vmatprep.subr.mxu0 0.0
        %650 = vmatpush2.msra.mxu0 0.0
        %651 = vmatprep.subr.mxu0 0.0
        %652 = vmatpush2.msra.mxu0 0.0
        %653 = vmatprep.subr.mxu0 0.0
        %654 = vmatpush2.msra.mxu0 0.0
        %655 = vmatprep.subr.mxu0 0.0
        %656 = vmatpush2.msra.mxu0 0.0
        %657 = vmatprep.subr.mxu0 0.0
        %658 = vmatpush2.msra.mxu0 0.0
        %659 = vmatprep.subr.mxu0 0.0
        %660 = vmatpush2.msra.mxu0 0.0
        %661 = vmatprep.subr.mxu0 0.0
        %662 = vmatpush2.msra.mxu0 0.0
        %663 = vmatprep.subr.mxu0 0.0
        %664 = vmatpush2.msra.mxu0 0.0
        %665 = vmatprep.subr.mxu0 0.0
        %666 = vmatpush2.msra.mxu0 0.0
        %667 = vmatprep.subr.mxu0 0.0
        %668 = vmatpush2.msra.mxu0 0.0
        %669 = vmatprep.mubr.f32.mxu0 0.0
        %v670 = vand.u32 %v184, 4294901760
        %671 = vmatmul.mubr.f32.gmra.mxu0 %v670
        %v672 = vpop.f32.mrf.mxu0
        %v673 = vadd.f32 %v595, %v672
        %v674 = vpop.f32.mrf.mxu0
        %675 = vmatprep.mubr.f32.mxu0 0.0
        %v676 = vand.u32 %v187, 4294901760
        %677 = vmatmul.mubr.f32.gmra.mxu0 %v676
        %v678 = vpop.f32.mrf.mxu0
        %v679 = vadd.f32 %v601, %v678
        %v680 = vpop.f32.mrf.mxu0
        %681 = vdwg.mxu0
        %s682 = scalar_lea.vmem %s1, 4
        %v683 = vld [vmem:[%s682] sm:$0xf]
        %v685 = vsel %vm189, %v683, 0
        %687 = vmatprep.subr.mxu0 0.0
        %688 = vmatpush1.msra.mxu0 0.0
        %689 = vmatprep.subr.mxu0 0.0
        %690 = vmatpush1.msra.mxu0 0.0
        %691 = vmatprep.subr.mxu0 0.0
        %692 = vmatpush1.msra.mxu0 0.0
        %693 = vmatprep.subr.mxu0 0.0
        %694 = vmatpush1.msra.mxu0 0.0
        %695 = vmatprep.subr.mxu0 0.0
        %696 = vmatpush1.msra.mxu0 0.0
        %697 = vmatprep.subr.mxu0 0.0
        %698 = vmatpush1.msra.mxu0 0.0
        %699 = vmatprep.subr.mxu0 0.0
        %700 = vmatpush1.msra.mxu0 0.0
        %701 = vmatprep.subr.mxu0 0.0
        %702 = vmatpush1.msra.mxu0 0.0
        %703 = vmatprep.subr.mxu0 0.0
        %704 = vmatpush1.msra.mxu0 0.0
        %705 = vmatprep.subr.mxu0 0.0
        %706 = vmatpush1.msra.mxu0 0.0
        %707 = vmatprep.subr.mxu0 0.0
        %708 = vmatpush1.msra.mxu0 0.0
        %709 = vmatprep.subr.mxu0 0.0
        %710 = vmatpush1.msra.mxu0 0.0
        %711 = vmatprep.subr.mxu0 0.0
        %712 = vmatpush1.msra.mxu0 0.0
        %713 = vmatprep.subr.mxu0 0.0
        %714 = vmatpush1.msra.mxu0 0.0
        %715 = vmatprep.subr.mxu0 0.0
        %716 = vmatpush1.msra.mxu0 0.0
        %717 = vmatprep.subr.mxu0 0.0
        %v718 = vand.u32 %v685, 4294901760
        %719 = vmatpush1.msra.mxu0 %v718
        %720 = vmatprep.subr.mxu0 0.0
        %721 = vmatpush2.msra.mxu0 0.0
        %722 = vmatprep.subr.mxu0 0.0
        %723 = vmatpush2.msra.mxu0 0.0
        %724 = vmatprep.subr.mxu0 0.0
        %725 = vmatpush2.msra.mxu0 0.0
        %726 = vmatprep.subr.mxu0 0.0
        %727 = vmatpush2.msra.mxu0 0.0
        %728 = vmatprep.subr.mxu0 0.0
        %729 = vmatpush2.msra.mxu0 0.0
        %730 = vmatprep.subr.mxu0 0.0
        %731 = vmatpush2.msra.mxu0 0.0
        %732 = vmatprep.subr.mxu0 0.0
        %733 = vmatpush2.msra.mxu0 0.0
        %734 = vmatprep.subr.mxu0 0.0
        %735 = vmatpush2.msra.mxu0 0.0
        %736 = vmatprep.subr.mxu0 0.0
        %737 = vmatpush2.msra.mxu0 0.0
        %738 = vmatprep.subr.mxu0 0.0
        %739 = vmatpush2.msra.mxu0 0.0
        %740 = vmatprep.subr.mxu0 0.0
        %741 = vmatpush2.msra.mxu0 0.0
        %742 = vmatprep.subr.mxu0 0.0
        %743 = vmatpush2.msra.mxu0 0.0
        %744 = vmatprep.subr.mxu0 0.0
        %745 = vmatpush2.msra.mxu0 0.0
        %746 = vmatprep.subr.mxu0 0.0
        %747 = vmatpush2.msra.mxu0 0.0
        %748 = vmatprep.subr.mxu0 0.0
        %749 = vmatpush2.msra.mxu0 0.0
        %750 = vmatprep.subr.mxu0 0.0
        %751 = vmatpush2.msra.mxu0 0.0
        %752 = vmatprep.mubr.f32.mxu0 0.0
        %v753 = vand.u32 %v184, 4294901760
        %v754 = vsub.f32 %v184, %v753
        %v755 = vand.u32 %v754, 4294901760
        %v756 = vsub.f32 %v754, %v755
        %v757 = vand.u32 %v756, 4294901760
        %758 = vmatmul.mubr.f32.gmra.mxu0 %v757
        %v759 = vpop.f32.mrf.mxu0
        %v760 = vadd.f32 %v180, %v759
        %v761 = vpop.f32.mrf.mxu0
        %762 = vmatprep.mubr.f32.mxu0 0.0
        %v763 = vand.u32 %v187, 4294901760
        %v764 = vsub.f32 %v187, %v763
        %v765 = vand.u32 %v764, 4294901760
        %v766 = vsub.f32 %v764, %v765
        %v767 = vand.u32 %v766, 4294901760
        %768 = vmatmul.mubr.f32.gmra.mxu0 %v767
        %v769 = vpop.f32.mrf.mxu0
        %v770 = vadd.f32 %v180, %v769
        %v771 = vpop.f32.mrf.mxu0
        %772 = vdwg.mxu0
        %773 = vmatprep.subr.mxu0 0.0
        %774 = vmatpush1.msra.mxu0 0.0
        %775 = vmatprep.subr.mxu0 0.0
        %776 = vmatpush1.msra.mxu0 0.0
        %777 = vmatprep.subr.mxu0 0.0
        %778 = vmatpush1.msra.mxu0 0.0
        %779 = vmatprep.subr.mxu0 0.0
        %780 = vmatpush1.msra.mxu0 0.0
        %781 = vmatprep.subr.mxu0 0.0
        %782 = vmatpush1.msra.mxu0 0.0
        %783 = vmatprep.subr.mxu0 0.0
        %784 = vmatpush1.msra.mxu0 0.0
        %785 = vmatprep.subr.mxu0 0.0
        %786 = vmatpush1.msra.mxu0 0.0
        %787 = vmatprep.subr.mxu0 0.0
        %788 = vmatpush1.msra.mxu0 0.0
        %789 = vmatprep.subr.mxu0 0.0
        %790 = vmatpush1.msra.mxu0 0.0
        %791 = vmatprep.subr.mxu0 0.0
        %792 = vmatpush1.msra.mxu0 0.0
        %793 = vmatprep.subr.mxu0 0.0
        %794 = vmatpush1.msra.mxu0 0.0
        %795 = vmatprep.subr.mxu0 0.0
        %796 = vmatpush1.msra.mxu0 0.0
        %797 = vmatprep.subr.mxu0 0.0
        %798 = vmatpush1.msra.mxu0 0.0
        %799 = vmatprep.subr.mxu0 0.0
        %800 = vmatpush1.msra.mxu0 0.0
        %801 = vmatprep.subr.mxu0 0.0
        %802 = vmatpush1.msra.mxu0 0.0
        %803 = vmatprep.subr.mxu0 0.0
        %v804 = vand.u32 %v685, 4294901760
        %v805 = vsub.f32 %v685, %v804
        %v806 = vand.u32 %v805, 4294901760
        %v807 = vsub.f32 %v805, %v806
        %v808 = vand.u32 %v807, 4294901760
        %809 = vmatpush1.msra.mxu0 %v808
        %810 = vmatprep.subr.mxu0 0.0
        %811 = vmatpush2.msra.mxu0 0.0
        %812 = vmatprep.subr.mxu0 0.0
        %813 = vmatpush2.msra.mxu0 0.0
        %814 = vmatprep.subr.mxu0 0.0
        %815 = vmatpush2.msra.mxu0 0.0
        %816 = vmatprep.subr.mxu0 0.0
        %817 = vmatpush2.msra.mxu0 0.0
        %818 = vmatprep.subr.mxu0 0.0
        %819 = vmatpush2.msra.mxu0 0.0
        %820 = vmatprep.subr.mxu0 0.0
        %821 = vmatpush2.msra.mxu0 0.0
        %822 = vmatprep.subr.mxu0 0.0
        %823 = vmatpush2.msra.mxu0 0.0
        %824 = vmatprep.subr.mxu0 0.0
        %825 = vmatpush2.msra.mxu0 0.0
        %826 = vmatprep.subr.mxu0 0.0
        %827 = vmatpush2.msra.mxu0 0.0
        %828 = vmatprep.subr.mxu0 0.0
        %829 = vmatpush2.msra.mxu0 0.0
        %830 = vmatprep.subr.mxu0 0.0
        %831 = vmatpush2.msra.mxu0 0.0
        %832 = vmatprep.subr.mxu0 0.0
        %833 = vmatpush2.msra.mxu0 0.0
        %834 = vmatprep.subr.mxu0 0.0
        %835 = vmatpush2.msra.mxu0 0.0
        %836 = vmatprep.subr.mxu0 0.0
        %837 = vmatpush2.msra.mxu0 0.0
        %838 = vmatprep.subr.mxu0 0.0
        %839 = vmatpush2.msra.mxu0 0.0
        %840 = vmatprep.subr.mxu0 0.0
        %841 = vmatpush2.msra.mxu0 0.0
        %842 = vmatprep.mubr.f32.mxu0 0.0
        %v843 = vand.u32 %v184, 4294901760
        %844 = vmatmul.mubr.f32.gmra.mxu0 %v843
        %v845 = vpop.f32.mrf.mxu0
        %v846 = vadd.f32 %v760, %v845
        %v847 = vpop.f32.mrf.mxu0
        %848 = vmatprep.mubr.f32.mxu0 0.0
        %v849 = vand.u32 %v187, 4294901760
        %850 = vmatmul.mubr.f32.gmra.mxu0 %v849
        %v851 = vpop.f32.mrf.mxu0
        %v852 = vadd.f32 %v770, %v851
        %v853 = vpop.f32.mrf.mxu0
        %854 = vdwg.mxu0
        %855 = vmatprep.subr.mxu0 0.0
        %856 = vmatpush1.msra.mxu0 0.0
        %857 = vmatprep.subr.mxu0 0.0
        %858 = vmatpush1.msra.mxu0 0.0
        %859 = vmatprep.subr.mxu0 0.0
        %860 = vmatpush1.msra.mxu0 0.0
        %861 = vmatprep.subr.mxu0 0.0
        %862 = vmatpush1.msra.mxu0 0.0
        %863 = vmatprep.subr.mxu0 0.0
        %864 = vmatpush1.msra.mxu0 0.0
        %865 = vmatprep.subr.mxu0 0.0
        %866 = vmatpush1.msra.mxu0 0.0
        %867 = vmatprep.subr.mxu0 0.0
        %868 = vmatpush1.msra.mxu0 0.0
        %869 = vmatprep.subr.mxu0 0.0
        %870 = vmatpush1.msra.mxu0 0.0
        %871 = vmatprep.subr.mxu0 0.0
        %872 = vmatpush1.msra.mxu0 0.0
        %873 = vmatprep.subr.mxu0 0.0
        %874 = vmatpush1.msra.mxu0 0.0
        %875 = vmatprep.subr.mxu0 0.0
        %876 = vmatpush1.msra.mxu0 0.0
        %877 = vmatprep.subr.mxu0 0.0
        %878 = vmatpush1.msra.mxu0 0.0
        %879 = vmatprep.subr.mxu0 0.0
        %880 = vmatpush1.msra.mxu0 0.0
        %881 = vmatprep.subr.mxu0 0.0
        %882 = vmatpush1.msra.mxu0 0.0
        %883 = vmatprep.subr.mxu0 0.0
        %884 = vmatpush1.msra.mxu0 0.0
        %885 = vmatprep.subr.mxu0 0.0
        %v886 = vand.u32 %v685, 4294901760
        %v887 = vsub.f32 %v685, %v886
        %888 = vmatpush1.msra.mxu0 %v887
        %889 = vmatprep.subr.mxu0 0.0
        %890 = vmatpush2.msra.mxu0 0.0
        %891 = vmatprep.subr.mxu0 0.0
        %892 = vmatpush2.msra.mxu0 0.0
        %893 = vmatprep.subr.mxu0 0.0
        %894 = vmatpush2.msra.mxu0 0.0
        %895 = vmatprep.subr.mxu0 0.0
        %896 = vmatpush2.msra.mxu0 0.0
        %897 = vmatprep.subr.mxu0 0.0
        %898 = vmatpush2.msra.mxu0 0.0
        %899 = vmatprep.subr.mxu0 0.0
        %900 = vmatpush2.msra.mxu0 0.0
        %901 = vmatprep.subr.mxu0 0.0
        %902 = vmatpush2.msra.mxu0 0.0
        %903 = vmatprep.subr.mxu0 0.0
        %904 = vmatpush2.msra.mxu0 0.0
        %905 = vmatprep.subr.mxu0 0.0
        %906 = vmatpush2.msra.mxu0 0.0
        %907 = vmatprep.subr.mxu0 0.0
        %908 = vmatpush2.msra.mxu0 0.0
        %909 = vmatprep.subr.mxu0 0.0
        %910 = vmatpush2.msra.mxu0 0.0
        %911 = vmatprep.subr.mxu0 0.0
        %912 = vmatpush2.msra.mxu0 0.0
        %913 = vmatprep.subr.mxu0 0.0
        %914 = vmatpush2.msra.mxu0 0.0
        %915 = vmatprep.subr.mxu0 0.0
        %916 = vmatpush2.msra.mxu0 0.0
        %917 = vmatprep.subr.mxu0 0.0
        %918 = vmatpush2.msra.mxu0 0.0
        %919 = vmatprep.subr.mxu0 0.0
        %920 = vmatpush2.msra.mxu0 0.0
        %921 = vmatprep.mubr.f32.mxu0 0.0
        %v922 = vand.u32 %v184, 4294901760
        %v923 = vsub.f32 %v184, %v922
        %924 = vmatmul.mubr.f32.gmra.mxu0 %v923
        %v925 = vpop.f32.mrf.mxu0
        %v926 = vadd.f32 %v846, %v925
        %v927 = vpop.f32.mrf.mxu0
        %928 = vmatprep.mubr.f32.mxu0 0.0
        %v929 = vand.u32 %v187, 4294901760
        %v930 = vsub.f32 %v187, %v929
        %931 = vmatmul.mubr.f32.gmra.mxu0 %v930
        %v932 = vpop.f32.mrf.mxu0
        %v933 = vadd.f32 %v852, %v932
        %v934 = vpop.f32.mrf.mxu0
        %935 = vdwg.mxu0
        %936 = vmatprep.subr.mxu0 0.0
        %937 = vmatpush1.msra.mxu0 0.0
        %938 = vmatprep.subr.mxu0 0.0
        %939 = vmatpush1.msra.mxu0 0.0
        %940 = vmatprep.subr.mxu0 0.0
        %941 = vmatpush1.msra.mxu0 0.0
        %942 = vmatprep.subr.mxu0 0.0
        %943 = vmatpush1.msra.mxu0 0.0
        %944 = vmatprep.subr.mxu0 0.0
        %945 = vmatpush1.msra.mxu0 0.0
        %946 = vmatprep.subr.mxu0 0.0
        %947 = vmatpush1.msra.mxu0 0.0
        %948 = vmatprep.subr.mxu0 0.0
        %949 = vmatpush1.msra.mxu0 0.0
        %950 = vmatprep.subr.mxu0 0.0
        %951 = vmatpush1.msra.mxu0 0.0
        %952 = vmatprep.subr.mxu0 0.0
        %953 = vmatpush1.msra.mxu0 0.0
        %954 = vmatprep.subr.mxu0 0.0
        %955 = vmatpush1.msra.mxu0 0.0
        %956 = vmatprep.subr.mxu0 0.0
        %957 = vmatpush1.msra.mxu0 0.0
        %958 = vmatprep.subr.mxu0 0.0
        %959 = vmatpush1.msra.mxu0 0.0
        %960 = vmatprep.subr.mxu0 0.0
        %961 = vmatpush1.msra.mxu0 0.0
        %962 = vmatprep.subr.mxu0 0.0
        %963 = vmatpush1.msra.mxu0 0.0
        %964 = vmatprep.subr.mxu0 0.0
        %965 = vmatpush1.msra.mxu0 0.0
        %966 = vmatprep.subr.mxu0 0.0
        %v967 = vand.u32 %v685, 4294901760
        %968 = vmatpush1.msra.mxu0 %v967
        %969 = vmatprep.subr.mxu0 0.0
        %970 = vmatpush2.msra.mxu0 0.0
        %971 = vmatprep.subr.mxu0 0.0
        %972 = vmatpush2.msra.mxu0 0.0
        %973 = vmatprep.subr.mxu0 0.0
        %974 = vmatpush2.msra.mxu0 0.0
        %975 = vmatprep.subr.mxu0 0.0
        %976 = vmatpush2.msra.mxu0 0.0
        %977 = vmatprep.subr.mxu0 0.0
        %978 = vmatpush2.msra.mxu0 0.0
        %979 = vmatprep.subr.mxu0 0.0
        %980 = vmatpush2.msra.mxu0 0.0
        %981 = vmatprep.subr.mxu0 0.0
        %982 = vmatpush2.msra.mxu0 0.0
        %983 = vmatprep.subr.mxu0 0.0
        %984 = vmatpush2.msra.mxu0 0.0
        %985 = vmatprep.subr.mxu0 0.0
        %986 = vmatpush2.msra.mxu0 0.0
        %987 = vmatprep.subr.mxu0 0.0
        %988 = vmatpush2.msra.mxu0 0.0
        %989 = vmatprep.subr.mxu0 0.0
        %990 = vmatpush2.msra.mxu0 0.0
        %991 = vmatprep.subr.mxu0 0.0
        %992 = vmatpush2.msra.mxu0 0.0
        %993 = vmatprep.subr.mxu0 0.0
        %994 = vmatpush2.msra.mxu0 0.0
        %995 = vmatprep.subr.mxu0 0.0
        %996 = vmatpush2.msra.mxu0 0.0
        %997 = vmatprep.subr.mxu0 0.0
        %998 = vmatpush2.msra.mxu0 0.0
        %999 = vmatprep.subr.mxu0 0.0
        %1000 = vmatpush2.msra.mxu0 0.0
        %1001 = vmatprep.mubr.f32.mxu0 0.0
        %v1002 = vand.u32 %v184, 4294901760
        %v1003 = vsub.f32 %v184, %v1002
        %v1004 = vand.u32 %v1003, 4294901760
        %1005 = vmatmul.mubr.f32.gmra.mxu0 %v1004
        %v1006 = vpop.f32.mrf.mxu0
        %v1007 = vadd.f32 %v926, %v1006
        %v1008 = vpop.f32.mrf.mxu0
        %1009 = vmatprep.mubr.f32.mxu0 0.0
        %v1010 = vand.u32 %v187, 4294901760
        %v1011 = vsub.f32 %v187, %v1010
        %v1012 = vand.u32 %v1011, 4294901760
        %1013 = vmatmul.mubr.f32.gmra.mxu0 %v1012
        %v1014 = vpop.f32.mrf.mxu0
        %v1015 = vadd.f32 %v933, %v1014
        %v1016 = vpop.f32.mrf.mxu0
        %1017 = vdwg.mxu0
        %1018 = vmatprep.subr.mxu0 0.0
        %1019 = vmatpush1.msra.mxu0 0.0
        %1020 = vmatprep.subr.mxu0 0.0
        %1021 = vmatpush1.msra.mxu0 0.0
        %1022 = vmatprep.subr.mxu0 0.0
        %1023 = vmatpush1.msra.mxu0 0.0
        %1024 = vmatprep.subr.mxu0 0.0
        %1025 = vmatpush1.msra.mxu0 0.0
        %1026 = vmatprep.subr.mxu0 0.0
        %1027 = vmatpush1.msra.mxu0 0.0
        %1028 = vmatprep.subr.mxu0 0.0
        %1029 = vmatpush1.msra.mxu0 0.0
        %1030 = vmatprep.subr.mxu0 0.0
        %1031 = vmatpush1.msra.mxu0 0.0
        %1032 = vmatprep.subr.mxu0 0.0
        %1033 = vmatpush1.msra.mxu0 0.0
        %1034 = vmatprep.subr.mxu0 0.0
        %1035 = vmatpush1.msra.mxu0 0.0
        %1036 = vmatprep.subr.mxu0 0.0
        %1037 = vmatpush1.msra.mxu0 0.0
        %1038 = vmatprep.subr.mxu0 0.0
        %1039 = vmatpush1.msra.mxu0 0.0
        %1040 = vmatprep.subr.mxu0 0.0
        %1041 = vmatpush1.msra.mxu0 0.0
        %1042 = vmatprep.subr.mxu0 0.0
        %1043 = vmatpush1.msra.mxu0 0.0
        %1044 = vmatprep.subr.mxu0 0.0
        %1045 = vmatpush1.msra.mxu0 0.0
        %1046 = vmatprep.subr.mxu0 0.0
        %1047 = vmatpush1.msra.mxu0 0.0
        %1048 = vmatprep.subr.mxu0 0.0
        %v1049 = vand.u32 %v685, 4294901760
        %v1050 = vsub.f32 %v685, %v1049
        %v1051 = vand.u32 %v1050, 4294901760
        %1052 = vmatpush1.msra.mxu0 %v1051
        %1053 = vmatprep.subr.mxu0 0.0
        %1054 = vmatpush2.msra.mxu0 0.0
        %1055 = vmatprep.subr.mxu0 0.0
        %1056 = vmatpush2.msra.mxu0 0.0
        %1057 = vmatprep.subr.mxu0 0.0
        %1058 = vmatpush2.msra.mxu0 0.0
        %1059 = vmatprep.subr.mxu0 0.0
        %1060 = vmatpush2.msra.mxu0 0.0
        %1061 = vmatprep.subr.mxu0 0.0
        %1062 = vmatpush2.msra.mxu0 0.0
        %1063 = vmatprep.subr.mxu0 0.0
        %1064 = vmatpush2.msra.mxu0 0.0
        %1065 = vmatprep.subr.mxu0 0.0
        %1066 = vmatpush2.msra.mxu0 0.0
        %1067 = vmatprep.subr.mxu0 0.0
        %1068 = vmatpush2.msra.mxu0 0.0
        %1069 = vmatprep.subr.mxu0 0.0
        %1070 = vmatpush2.msra.mxu0 0.0
        %1071 = vmatprep.subr.mxu0 0.0
        %1072 = vmatpush2.msra.mxu0 0.0
        %1073 = vmatprep.subr.mxu0 0.0
        %1074 = vmatpush2.msra.mxu0 0.0
        %1075 = vmatprep.subr.mxu0 0.0
        %1076 = vmatpush2.msra.mxu0 0.0
        %1077 = vmatprep.subr.mxu0 0.0
        %1078 = vmatpush2.msra.mxu0 0.0
        %1079 = vmatprep.subr.mxu0 0.0
        %1080 = vmatpush2.msra.mxu0 0.0
        %1081 = vmatprep.subr.mxu0 0.0
        %1082 = vmatpush2.msra.mxu0 0.0
        %1083 = vmatprep.subr.mxu0 0.0
        %1084 = vmatpush2.msra.mxu0 0.0
        %1085 = vmatprep.mubr.f32.mxu0 0.0
        %v1086 = vand.u32 %v184, 4294901760
        %1087 = vmatmul.mubr.f32.gmra.mxu0 %v1086
        %v1088 = vpop.f32.mrf.mxu0
        %v1089 = vadd.f32 %v1007, %v1088
        %v1090 = vpop.f32.mrf.mxu0
        %1091 = vmatprep.mubr.f32.mxu0 0.0
        %v1092 = vand.u32 %v187, 4294901760
        %1093 = vmatmul.mubr.f32.gmra.mxu0 %v1092
        %v1094 = vpop.f32.mrf.mxu0
        %v1095 = vadd.f32 %v1015, %v1094
        %v1096 = vpop.f32.mrf.mxu0
        %1097 = vdwg.mxu0
        %1098 = vmatprep.subr.mxu0 0.0
        %1099 = vmatpush1.msra.mxu0 0.0
        %1100 = vmatprep.subr.mxu0 0.0
        %1101 = vmatpush1.msra.mxu0 0.0
        %1102 = vmatprep.subr.mxu0 0.0
        %1103 = vmatpush1.msra.mxu0 0.0
        %1104 = vmatprep.subr.mxu0 0.0
        %1105 = vmatpush1.msra.mxu0 0.0
        %1106 = vmatprep.subr.mxu0 0.0
        %1107 = vmatpush1.msra.mxu0 0.0
        %1108 = vmatprep.subr.mxu0 0.0
        %1109 = vmatpush1.msra.mxu0 0.0
        %1110 = vmatprep.subr.mxu0 0.0
        %1111 = vmatpush1.msra.mxu0 0.0
        %1112 = vmatprep.subr.mxu0 0.0
        %1113 = vmatpush1.msra.mxu0 0.0
        %1114 = vmatprep.subr.mxu0 0.0
        %1115 = vmatpush1.msra.mxu0 0.0
        %1116 = vmatprep.subr.mxu0 0.0
        %1117 = vmatpush1.msra.mxu0 0.0
        %1118 = vmatprep.subr.mxu0 0.0
        %1119 = vmatpush1.msra.mxu0 0.0
        %1120 = vmatprep.subr.mxu0 0.0
        %1121 = vmatpush1.msra.mxu0 0.0
        %1122 = vmatprep.subr.mxu0 0.0
        %1123 = vmatpush1.msra.mxu0 0.0
        %1124 = vmatprep.subr.mxu0 0.0
        %1125 = vmatpush1.msra.mxu0 0.0
        %1126 = vmatprep.subr.mxu0 0.0
        %1127 = vmatpush1.msra.mxu0 0.0
        %1128 = vmatprep.subr.mxu0 0.0
        %v1129 = vand.u32 %v685, 4294901760
        %1130 = vmatpush1.msra.mxu0 %v1129
        %1131 = vmatprep.subr.mxu0 0.0
        %1132 = vmatpush2.msra.mxu0 0.0
        %1133 = vmatprep.subr.mxu0 0.0
        %1134 = vmatpush2.msra.mxu0 0.0
        %1135 = vmatprep.subr.mxu0 0.0
        %1136 = vmatpush2.msra.mxu0 0.0
        %1137 = vmatprep.subr.mxu0 0.0
        %1138 = vmatpush2.msra.mxu0 0.0
        %1139 = vmatprep.subr.mxu0 0.0
        %1140 = vmatpush2.msra.mxu0 0.0
        %1141 = vmatprep.subr.mxu0 0.0
        %1142 = vmatpush2.msra.mxu0 0.0
        %1143 = vmatprep.subr.mxu0 0.0
        %1144 = vmatpush2.msra.mxu0 0.0
        %1145 = vmatprep.subr.mxu0 0.0
        %1146 = vmatpush2.msra.mxu0 0.0
        %1147 = vmatprep.subr.mxu0 0.0
        %1148 = vmatpush2.msra.mxu0 0.0
        %1149 = vmatprep.subr.mxu0 0.0
        %1150 = vmatpush2.msra.mxu0 0.0
        %1151 = vmatprep.subr.mxu0 0.0
        %1152 = vmatpush2.msra.mxu0 0.0
        %1153 = vmatprep.subr.mxu0 0.0
        %1154 = vmatpush2.msra.mxu0 0.0
        %1155 = vmatprep.subr.mxu0 0.0
        %1156 = vmatpush2.msra.mxu0 0.0
        %1157 = vmatprep.subr.mxu0 0.0
        %1158 = vmatpush2.msra.mxu0 0.0
        %1159 = vmatprep.subr.mxu0 0.0
        %1160 = vmatpush2.msra.mxu0 0.0
        %1161 = vmatprep.subr.mxu0 0.0
        %1162 = vmatpush2.msra.mxu0 0.0
        %1163 = vmatprep.mubr.f32.mxu0 0.0
        %v1164 = vand.u32 %v184, 4294901760
        %1165 = vmatmul.mubr.f32.gmra.mxu0 %v1164
        %v1166 = vpop.f32.mrf.mxu0
        %v1167 = vadd.f32 %v1089, %v1166
        %v1168 = vpop.f32.mrf.mxu0
        %1169 = vmatprep.mubr.f32.mxu0 0.0
        %v1170 = vand.u32 %v187, 4294901760
        %1171 = vmatmul.mubr.f32.gmra.mxu0 %v1170
        %v1172 = vpop.f32.mrf.mxu0
        %v1173 = vadd.f32 %v1095, %v1172
        %v1174 = vpop.f32.mrf.mxu0
        %1175 = vdwg.mxu0
        %v1178 = vcombine.high %v673, %v673
        %v1179 = vcombine.high %v679, %v679
        %vm1182 = vcmask 60416
        %1183 = vst.msk [vmem:[%s164] sm:$0xf] %vm1182, %v673
        %1184 = vst.msk [vmem:[%s164 + $0x8] sm:$0xf] %vm1182, %v1178
        %1185 = vst.msk [vmem:[%s164 + $0x10] sm:$0xf] %vm1182, %v679
        %1186 = vst.msk [vmem:[%s164 + $0x18] sm:$0xf] %vm1182, %v1179
        %v1189 = vcombine.high %v1167, %v1167
        %v1190 = vcombine.high %v1173, %v1173
        %s1193 = scalar_lea.vmem %s164, 4 [#allocation2]
        %1194 = vst.msk [vmem:[%s1193] sm:$0xf] %vm1182, %v1167
        %1195 = vst.msk [vmem:[%s1193 + $0x8] sm:$0xf] %vm1182, %v1189
        %1196 = vst.msk [vmem:[%s1193 + $0x10] sm:$0xf] %vm1182, %v1173
        %1197 = vst.msk [vmem:[%s1193 + $0x18] sm:$0xf] %vm1182, %v1190
        %s1198 = sand.u32 %s93, 1
        %s1199 = scalar_lea.sflag [#allocation3], %s1198
        %s1200 = sand.u32 %s93, 1
        %s1201 = smul.addr %s1200, 32
        %s1202 = scalar_lea.vmem [#allocation2], %s1201
        // Predicated region
        $region33: #{tpu_custom_call.1} parent=31 // pred_check
          %p1203 = pneg %p103
        $region34: #{tpu_custom_call.1} parent=31 // pred_check_branch
          %1205 = sbr.rel (%p1203) target = $region36
        $region35: #{tpu_custom_call.1} parent=31 // pred_region
          %s1206 = smul.u32 4, %s17
          %s1208 = ssub.s32 512, 512
          %1209 = vsyncadd %s1199, %s1208
          %s1210 = smul.addr %s1206, 2
          %s1211 = smul.addr %s1210, 64
          %s1212 = scalar_lea.hbm %s3, %s1211
          %s1213 = sshll.u32 %s1202, 4
          %s1214 = int_to_ptr.vmem [resolvable:$true] %s1213
          %1219 = dma.vmem_to_hbm [thread:$0]  %s1214, 512, %s1212, %s1199, 64, 64, 4
        $region36: #{tpu_custom_call.1} parent=31 // pred_fallthru
          _
      $region32: #{tpu_custom_call.1} parent=5 // pred_fallthru
        _
      %p1220 = scmp.le.s32.totalorder 2, %s12
      // Predicated region
      $region37: #{tpu_custom_call.1} parent=5 // pred_check
        %p1221 = pneg %p1220
      $region38: #{tpu_custom_call.1} parent=5 // pred_check_branch
        %1223 = sbr.rel (%p1221) target = $region40
      $region39: #{tpu_custom_call.1} parent=5 // pred_region
        %s1224 = ssub.s32 %s12, 2
        // Predicated region
        $region41: #{tpu_custom_call.1} parent=39 // pred_check
          %p1225 = pneg %p109
        $region42: #{tpu_custom_call.1} parent=39 // pred_check_branch
          %1227 = sbr.rel (%p1225) target = $region44
        $region43: #{tpu_custom_call.1} parent=39 // pred_region
          %s1228 = sand.u32 %s94, 1
          %s1229 = scalar_lea.sflag [#allocation3], %s1228
          %s1230 = sand.u32 %s94, 1
          %s1231 = smul.addr %s1230, 32
          %s1232 = scalar_lea.vmem [#allocation2], %s1231
          %1233 = dma.done %s1229, 512
        $region44: #{tpu_custom_call.1} parent=39 // pred_fallthru
          _
      $region40: #{tpu_custom_call.1} parent=5 // pred_fallthru
        _
    $region6: #{tpu_custom_call.1} parent=1 // loop_footer
      %s16 = sadd.s32 1, %s12
    $region7: #{tpu_custom_call.1} parent=1 // loop_footer_branch
      %11 = sbr.rel target = $region3
    $region8: #{tpu_custom_call.1} parent=1 // loop_exit
      _
    %1234 = vsyncpa [#allocation3], 1
    %s1235 = scalar_lea.sflag [#allocation3], 1
    %1236 = vsyncpa %s1235, 1

</llo_original>
